<compile_context>
chip_gen: v7x
topology: tpu7x:2x2x1
jax: 0.10.0
libtpu: 0.0.40
codegen_flags: <defaults>
</compile_context>

<pallas_src>
import functools

import jax
import jax.numpy as jnp
from jax import lax
from jax.experimental import pallas as pl
from jax.experimental.pallas import tpu as pltpu

_HID_PAD = 128   # n_hidden padded up to a full 128-lane width (MXU friendly)
_OUT_PAD = 128   # class axis padded to 128 lanes -> unmasked, lane-dense stores


def _round_up(x, m):
    return ((x + m - 1) // m) * m


def _policy_kernel(n_outputs, x_ref, w1_ref, b1_ref, w2_ref, b2_ref,
                   w3_ref, b3_ref, o_ref):
    """One batch tile of softmax(relu(relu(x@W1+b1)@W2+b2)@W3+b3, dim=1).

    Matmul operands are bf16 (MXU-native on v6e/v7x); accumulation and all
    elementwise work (bias add / ReLU / softmax) stay in f32 (v5e's VPU/EUP
    have no bf16 path).
    """
    x = x_ref[...]                                            # (TB, n_in) bf16

    h1 = jnp.dot(x, w1_ref[...], preferred_element_type=jnp.float32)
    h1 = jnp.maximum(h1 + b1_ref[...], 0.0)                   # f32

    h2 = jnp.dot(h1.astype(jnp.bfloat16), w2_ref[...],
                 preferred_element_type=jnp.float32)
    h2 = jnp.maximum(h2 + b2_ref[...], 0.0)                   # f32

    logits = jnp.dot(h2.astype(jnp.bfloat16), w3_ref[...],
                     preferred_element_type=jnp.float32)
    logits = logits + b3_ref[...]                             # (TB, OUT_PAD) f32

    # Mask padded class columns, then numerically stable softmax over dim=1.
    col = lax.broadcasted_iota(jnp.int32, logits.shape, 1)
    logits = jnp.where(col < n_outputs, logits, jnp.float32(-1e30))
    m = jnp.max(logits, axis=1, keepdims=True)
    e = jnp.exp(logits - m)
    denom = jnp.sum(e, axis=1, keepdims=True)
    # Exact divide keeps sum(probs) == 1 to ~1e-7.  (For n_outputs == 2 a
    # closed-form sigmoid(l0 - l1), or pl.reciprocal(denom, approx=True),
    # would shave XLU work at the cost of looser normalization.)
    o_ref[...] = (e / denom).astype(o_ref.dtype)


@functools.partial(jax.jit, static_argnames=("tile_b",))
def policy_net_forward(x, w1, b1, w2, b2, w3, b3, *, tile_b=512):
    """PolicyNet forward for a whole batch of states in one Pallas call.

    Call this with a full rollout (hundreds/thousands of states) per call —
    per-env-step calls at CartPole shapes are pure launch overhead.
    """
    batch, n_in = x.shape
    n_hidden = w1.shape[1]
    n_outputs = w3.shape[1]

    tb = int(tile_b)
    batch_pad = _round_up(max(batch, 1), tb)

    # bf16 operands for the MXU; zero-pad hidden/class axes to full lane
    # width.  Padding is mathematically exact: ReLU(0 + 0) = 0 and zero
    # weight rows/columns contribute nothing to the real outputs.
    xb = jnp.pad(x.astype(jnp.bfloat16), ((0, batch_pad - batch), (0, 0)))
    w1p = jnp.pad(w1, ((0, 0), (0, _HID_PAD - n_hidden))).astype(jnp.bfloat16)
    b1p = jnp.pad(b1, ((0, 0), (0, _HID_PAD - n_hidden)))
    w2p = jnp.pad(w2, ((0, _HID_PAD - n_hidden),
                       (0, _HID_PAD - n_hidden))).astype(jnp.bfloat16)
    b2p = jnp.pad(b2, ((0, 0), (0, _HID_PAD - n_hidden)))
    w3p = jnp.pad(w3, ((0, _HID_PAD - n_hidden),
                       (0, _OUT_PAD - n_outputs))).astype(jnp.bfloat16)
    b3p = jnp.pad(b3, ((0, 0), (0, _OUT_PAD - n_outputs)))

    grid = (batch_pad // tb,)

    resident = lambda i: (0, 0)       # weights/biases stay in VMEM across steps
    batch_tiled = lambda i: (i, 0)    # x / output walk the batch axis

    flops = 2 * batch_pad * (n_in * _HID_PAD
                             + _HID_PAD * _HID_PAD
                             + _HID_PAD * _OUT_PAD)
    bytes_accessed = (xb.size * 2
                      + (w1p.size + w2p.size + w3p.size) * 2
                      + (b1p.size + b2p.size + b3p.size) * 4
                      + batch_pad * _OUT_PAD * 4)

    out = pl.pallas_call(
        functools.partial(_policy_kernel, n_outputs),
        out_shape=jax.ShapeDtypeStruct((batch_pad, _OUT_PAD), jnp.float32),
        grid=grid,
        in_specs=[
            pl.BlockSpec((tb, n_in), batch_tiled),
            pl.BlockSpec((n_in, _HID_PAD), resident),
            pl.BlockSpec((1, _HID_PAD), resident),
            pl.BlockSpec((_HID_PAD, _HID_PAD), resident),
            pl.BlockSpec((1, _HID_PAD), resident),
            pl.BlockSpec((_HID_PAD, _OUT_PAD), resident),
            pl.BlockSpec((1, _OUT_PAD), resident),
        ],
        out_specs=pl.BlockSpec((tb, _OUT_PAD), batch_tiled),
        compiler_params=pltpu.CompilerParams(
            dimension_semantics=("parallel",)),
        cost_estimate=pl.CostEstimate(
            flops=flops,
            transcendentals=batch_pad * _OUT_PAD,
            bytes_accessed=bytes_accessed),
    )(xb, w1p, b1p, w2p, b2p, w3p, b3p)

    return out[:batch, :n_outputs]


def _reference_forward_f32(x, w1, b1, w2, b2, w3, b3):
    h = jnp.maximum(x @ w1 + b1, 0.0)
    h = jnp.maximum(h @ w2 + b2, 0.0)
    return jax.nn.softmax(h @ w3 + b3, axis=1)


def _reference_forward_bf16(x, w1, b1, w2, b2, w3, b3):
    """Reference matching the kernel's precision (bf16 MXU operands, f32 accum)."""
    f32 = jnp.float32
    h = jnp.dot(x.astype(jnp.bfloat16), w1.astype(jnp.bfloat16),
                preferred_element_type=f32)
    h = jnp.maximum(h + b1, 0.0)
    h = jnp.dot(h.astype(jnp.bfloat16), w2.astype(jnp.bfloat16),
                preferred_element_type=f32)
    h = jnp.maximum(h + b2, 0.0)
    logits = jnp.dot(h.astype(jnp.bfloat16), w3.astype(jnp.bfloat16),
                     preferred_element_type=f32) + b3
    return jax.nn.softmax(logits, axis=1)


def init_params(key, n_inputs, n_hidden, n_outputs):
    """Deterministic init mimicking nn.Linear's uniform(-1/sqrt(in), 1/sqrt(in))."""
    keys = jax.random.split(key, 6)

    def linear(kw, kb, fan_in, fan_out):
        bound = 1.0 / jnp.sqrt(jnp.float32(fan_in))
        w = jax.random.uniform(kw, (fan_in, fan_out), jnp.float32, -bound, bound)
        b = jax.random.uniform(kb, (1, fan_out), jnp.float32, -bound, bound)
        return w, b

    w1, b1 = linear(keys[0], keys[1], n_inputs, n_hidden)
    w2, b2 = linear(keys[2], keys[3], n_hidden, n_hidden)
    w3, b3 = linear(keys[4], keys[5], n_hidden, n_outputs)
    return w1, b1, w2, b2, w3, b3


# TODO(synk): training loop (gym rollouts, torch.multinomial sampling, Adam
# update) is host-side RL plumbing with no Pallas equivalent; only forward()
# is implemented as a kernel.

if __name__ == "__main__":
    # CartPole-v1: obs dim = 4, actions = 2; hidden = 64 (as in the module).
    n_inputs, n_hidden, n_outputs = 4, 64, 2
    batch = 500   # one rollout_limit worth of states batched into a single call

    key = jax.random.PRNGKey(0)
    kx, kp = jax.random.split(key)
    x = jax.random.normal(kx, (batch, n_inputs), jnp.float32)
    params = init_params(kp, n_inputs, n_hidden, n_outputs)

    # tile_b=128 here so the demo exercises several grid steps plus the
    # ragged-batch padding path; use 512-1024 for large multi-rollout batches.
    out = policy_net_forward(x, *params, tile_b=128)
    out = jax.block_until_ready(out)

    assert out.shape == (batch, n_outputs)
    # Probabilities sum to 1 along dim=1 (softmax normalization is exact).
    assert jnp.allclose(jnp.sum(out, axis=1), 1.0, atol=1e-5)

    # Check vs a reference using the same bf16 MXU operands / f32 accumulation.
    ref_mixed = _reference_forward_bf16(x, *params)
    assert jnp.allclose(out, ref_mixed, atol=1e-4, rtol=1e-3), (
        float(jnp.max(jnp.abs(out - ref_mixed))))

    # Looser sanity check vs the pure-f32 PyTorch-equivalent forward
    # (bf16 matmul inputs intentionally trade a little precision for speed).
    ref_f32 = _reference_forward_f32(x, *params)
    assert jnp.allclose(out, ref_f32, atol=5e-2), (
        float(jnp.max(jnp.abs(out - ref_f32))))

    print("KERNEL_OK")
</pallas_src>

<mosaic_0001>
module attributes {stable_mosaic.version = 11 : i64} {
  func.func @_policy_kernel(%arg0: i32, %arg1: memref<128x4xbf16, #tpu.memory_space<vmem>>, %arg2: memref<4x128xbf16, #tpu.memory_space<vmem>>, %arg3: memref<1x128xf32, #tpu.memory_space<vmem>>, %arg4: memref<128x128xbf16, #tpu.memory_space<vmem>>, %arg5: memref<1x128xf32, #tpu.memory_space<vmem>>, %arg6: memref<128x128xbf16, #tpu.memory_space<vmem>>, %arg7: memref<1x128xf32, #tpu.memory_space<vmem>>, %arg8: memref<128x128xf32, #tpu.memory_space<vmem>>) attributes {dimension_semantics = [#tpu.dimension_semantics<parallel>], iteration_bounds = array<i64: 4>, scalar_prefetch = 0 : i64, scratch_operands = 0 : i64, tpu.core_type = #tpu.core_type<tc>, window_params = [{transform_indices = @transform_0, window_bounds = array<i64: 128, 4>}, {pipeline_mode = #tpu.pipeline_mode<synchronous>, transform_indices = @transform_1, window_bounds = array<i64: 4, 128>}, {pipeline_mode = #tpu.pipeline_mode<synchronous>, transform_indices = @transform_2, window_bounds = array<i64: 1, 128>}, {pipeline_mode = #tpu.pipeline_mode<synchronous>, transform_indices = @transform_3, window_bounds = array<i64: 128, 128>}, {pipeline_mode = #tpu.pipeline_mode<synchronous>, transform_indices = @transform_4, window_bounds = array<i64: 1, 128>}, {pipeline_mode = #tpu.pipeline_mode<synchronous>, transform_indices = @transform_5, window_bounds = array<i64: 128, 128>}, {pipeline_mode = #tpu.pipeline_mode<synchronous>, transform_indices = @transform_6, window_bounds = array<i64: 1, 128>}, {transform_indices = @transform_7, window_bounds = array<i64: 128, 128>}]} {
    %c0 = arith.constant 0 : index
    %c0_0 = arith.constant 0 : index
    %0 = vector.load %arg1[%c0, %c0_0] : memref<128x4xbf16, #tpu.memory_space<vmem>>, vector<128x4xbf16>
    %c0_1 = arith.constant 0 : index
    %c0_2 = arith.constant 0 : index
    %1 = vector.load %arg2[%c0_1, %c0_2] : memref<4x128xbf16, #tpu.memory_space<vmem>>, vector<4x128xbf16>
    %cst = arith.constant dense<0.000000e+00> : vector<128x128xf32>
    %2 = tpu.matmul %0, %1, %cst {dimension_numbers = #tpu.dot_dimension_numbers<[1], [0], [0], [1], [0, 0, 1, 1], [], []>} : vector<128x4xbf16>, vector<4x128xbf16>, vector<128x128xf32> -> vector<128x128xf32>
    %c0_3 = arith.constant 0 : index
    %c0_4 = arith.constant 0 : index
    %3 = vector.load %arg3[%c0_3, %c0_4] : memref<1x128xf32, #tpu.memory_space<vmem>>, vector<1x128xf32>
    %4 = vector.broadcast %3 : vector<1x128xf32> to vector<128x128xf32>
    %5 = arith.addf %2, %4 : vector<128x128xf32>
    %cst_5 = arith.constant 0.000000e+00 : f32
    %6 = vector.broadcast %cst_5 : f32 to vector<128x128xf32>
    %7 = arith.maximumf %5, %6 : vector<128x128xf32>
    %8 = arith.truncf %7 : vector<128x128xf32> to vector<128x128xbf16>
    %c0_6 = arith.constant 0 : index
    %c0_7 = arith.constant 0 : index
    %9 = vector.load %arg4[%c0_6, %c0_7] : memref<128x128xbf16, #tpu.memory_space<vmem>>, vector<128x128xbf16>
    %cst_8 = arith.constant dense<0.000000e+00> : vector<128x128xf32>
    %10 = tpu.matmul %8, %9, %cst_8 {dimension_numbers = #tpu.dot_dimension_numbers<[1], [0], [0], [1], [0, 0, 1, 1], [], []>} : vector<128x128xbf16>, vector<128x128xbf16>, vector<128x128xf32> -> vector<128x128xf32>
    %c0_9 = arith.constant 0 : index
    %c0_10 = arith.constant 0 : index
    %11 = vector.load %arg5[%c0_9, %c0_10] : memref<1x128xf32, #tpu.memory_space<vmem>>, vector<1x128xf32>
    %12 = vector.broadcast %11 : vector<1x128xf32> to vector<128x128xf32>
    %13 = arith.addf %10, %12 : vector<128x128xf32>
    %cst_11 = arith.constant 0.000000e+00 : f32
    %14 = vector.broadcast %cst_11 : f32 to vector<128x128xf32>
    %15 = arith.maximumf %13, %14 : vector<128x128xf32>
    %16 = arith.truncf %15 : vector<128x128xf32> to vector<128x128xbf16>
    %c0_12 = arith.constant 0 : index
    %c0_13 = arith.constant 0 : index
    %17 = vector.load %arg6[%c0_12, %c0_13] : memref<128x128xbf16, #tpu.memory_space<vmem>>, vector<128x128xbf16>
    %cst_14 = arith.constant dense<0.000000e+00> : vector<128x128xf32>
    %18 = tpu.matmul %16, %17, %cst_14 {dimension_numbers = #tpu.dot_dimension_numbers<[1], [0], [0], [1], [0, 0, 1, 1], [], []>} : vector<128x128xbf16>, vector<128x128xbf16>, vector<128x128xf32> -> vector<128x128xf32>
    %c0_15 = arith.constant 0 : index
    %c0_16 = arith.constant 0 : index
    %19 = vector.load %arg7[%c0_15, %c0_16] : memref<1x128xf32, #tpu.memory_space<vmem>>, vector<1x128xf32>
    %20 = vector.broadcast %19 : vector<1x128xf32> to vector<128x128xf32>
    %21 = arith.addf %18, %20 : vector<128x128xf32>
    %22 = tpu.iota {dimensions = array<i32: 1>} : vector<128x128xi32>
    %c2_i32 = arith.constant 2 : i32
    %23 = vector.broadcast %c2_i32 : i32 to vector<128x128xi32>
    %24 = arith.cmpi slt, %22, %23 : vector<128x128xi32>
    %cst_17 = arith.constant -1.000000e+30 : f32
    %25 = vector.broadcast %cst_17 : f32 to vector<128x128xf32>
    %26 = arith.select %24, %21, %25 : vector<128x128xi1>, vector<128x128xf32>
    %cst_18 = arith.constant dense<0xFF800000> : vector<128xf32>
    %27 = vector.multi_reduction <maximumf>, %26, %cst_18 [1] : vector<128x128xf32> to vector<128xf32>
    %28 = vector.shape_cast %27 : vector<128xf32> to vector<128x1xf32>
    %29 = vector.broadcast %28 : vector<128x1xf32> to vector<128x128xf32>
    %30 = arith.subf %26, %29 : vector<128x128xf32>
    %31 = math.exp %30 : vector<128x128xf32>
    %cst_19 = arith.constant dense<0.000000e+00> : vector<128xf32>
    %32 = vector.multi_reduction <add>, %31, %cst_19 [1] : vector<128x128xf32> to vector<128xf32>
    %33 = vector.shape_cast %32 : vector<128xf32> to vector<128x1xf32>
    %34 = vector.broadcast %33 : vector<128x1xf32> to vector<128x128xf32>
    %35 = arith.divf %31, %34 : vector<128x128xf32>
    %c0_20 = arith.constant 0 : index
    %c0_21 = arith.constant 0 : index
    %36 = vector.load %arg8[%c0_20, %c0_21] : memref<128x128xf32, #tpu.memory_space<vmem>>, vector<128x128xf32>
    tpu.vector_store %arg8[%c0_20, %c0_21], %35 {strides = array<i32>} : memref<128x128xf32, #tpu.memory_space<vmem>>, vector<128x128xf32>,
    return
  }
  func.func @transform_0(%arg0: i32) -> (i32, i32) {
    %c0_i32 = arith.constant 0 : i32
    %c0_i32_0 = arith.constant 0 : i32
    return %arg0, %c0_i32 : i32, i32
  }
  func.func @transform_1(%arg0: i32) -> (i32, i32) {
    %c0_i32 = arith.constant 0 : i32
    %c0_i32_0 = arith.constant 0 : i32
    %c0_i32_1 = arith.constant 0 : i32
    return %c0_i32, %c0_i32_0 : i32, i32
  }
  func.func @transform_2(%arg0: i32) -> (i32, i32) {
    %c0_i32 = arith.constant 0 : i32
    %c0_i32_0 = arith.constant 0 : i32
    %c0_i32_1 = arith.constant 0 : i32
    return %c0_i32, %c0_i32_0 : i32, i32
  }
  func.func @transform_3(%arg0: i32) -> (i32, i32) {
    %c0_i32 = arith.constant 0 : i32
    %c0_i32_0 = arith.constant 0 : i32
    %c0_i32_1 = arith.constant 0 : i32
    return %c0_i32, %c0_i32_0 : i32, i32
  }
  func.func @transform_4(%arg0: i32) -> (i32, i32) {
    %c0_i32 = arith.constant 0 : i32
    %c0_i32_0 = arith.constant 0 : i32
    %c0_i32_1 = arith.constant 0 : i32
    return %c0_i32, %c0_i32_0 : i32, i32
  }
  func.func @transform_5(%arg0: i32) -> (i32, i32) {
    %c0_i32 = arith.constant 0 : i32
    %c0_i32_0 = arith.constant 0 : i32
    %c0_i32_1 = arith.constant 0 : i32
    return %c0_i32, %c0_i32_0 : i32, i32
  }
  func.func @transform_6(%arg0: i32) -> (i32, i32) {
    %c0_i32 = arith.constant 0 : i32
    %c0_i32_0 = arith.constant 0 : i32
    %c0_i32_1 = arith.constant 0 : i32
    return %c0_i32, %c0_i32_0 : i32, i32
  }
  func.func @transform_7(%arg0: i32) -> (i32, i32) {
    %c0_i32 = arith.constant 0 : i32
    %c0_i32_0 = arith.constant 0 : i32
    return %arg0, %c0_i32 : i32, i32
  }
}

</mosaic_0001>

<llo_original>
// kernel: policy_net_forward.1
$region0: #{policy_net_forward.1}
  #allocation0 [shape = 'u32[]', space=smem, size = 0x4, offset = 0x4, fixed_abs, tag = 'smem constant byte address 0x4 - core index']
  #allocation1 [shape = 'u32[144,128]{1,0:T(1,128)}', space=vmem, size = 0x12000, scoped, tag = 'internal scratch']
  %s0 = inlined_call_operand.vmem [shape: bf16[512,4], index: 0, kind: input, shape index: {}]
  %s1 = inlined_call_operand.vmem [shape: bf16[4,128], index: 1, kind: input, shape index: {}]
  %s2 = inlined_call_operand.vmem [shape: f32[1,128], index: 2, kind: input, shape index: {}]
  %s3 = inlined_call_operand.vmem [shape: bf16[128,128], index: 3, kind: input, shape index: {}]
  %s4 = inlined_call_operand.vmem [shape: f32[1,128], index: 4, kind: input, shape index: {}]
  %s5 = inlined_call_operand.vmem [shape: bf16[128,128], index: 5, kind: input, shape index: {}]
  %s6 = inlined_call_operand.vmem [shape: f32[1,128], index: 6, kind: input, shape index: {}]
  %s7 = inlined_call_operand.vmem [shape: f32[512,128], index: 7, kind: output, shape index: {}]
  %s8 = sld [smem:[#allocation0]]
  $region61: #{policy_net_forward.1} parent=0
    _
  %s10 = ssub.s32 1, %s8
  %s11 = scalar_select 0, %s10, %s8
  loop: start=0, step=1, limit=6
  $region2: #{policy_net_forward.1} parent=0 // loop_pre_header
    _
  $region3: #{policy_net_forward.1} parent=0 // loop_header
    %s13 = sphi 0, %s17
    %p14 = scmp.ge.s32.totalorder %s13, 6
    %s23 = sphi 0, %s25
    %s26 = sphi 0, %s23
    %s27 = sphi 0, %s26
    %s43 = sphi 0, %s27
    %s47 = sphi 0, %s47
    %s49 = sphi 0, %s47
    %s50 = sphi 0, %s49
    %s64 = sphi 0, %s50
    %s68 = sphi 0, %s68
    %s70 = sphi 0, %s68
    %s71 = sphi 0, %s70
    %s85 = sphi 0, %s71
    %s89 = sphi 0, %s89
    %s91 = sphi 0, %s89
    %s92 = sphi 0, %s91
    %s106 = sphi 0, %s92
    %s110 = sphi 0, %s110
    %s112 = sphi 0, %s110
    %s113 = sphi 0, %s112
    %s127 = sphi 0, %s113
    %s131 = sphi 0, %s131
    %s133 = sphi 0, %s131
    %s134 = sphi 0, %s133
    %s148 = sphi 0, %s134
    %s152 = sphi 0, %s152
    %s154 = sphi 0, %s152
    %s155 = sphi 0, %s154
    %s169 = sphi 0, %s155
    %s175 = sphi 0, %s177
    %s178 = sphi 0, %s175
    %s179 = sphi 0, %s178
    %s195 = sphi 0, %s179
  $region4: #{policy_net_forward.1} parent=0 // loop_header_branch
    %16 = sbr.rel (%p14) target = $region8
  $region5: #{policy_net_forward.1} parent=0 // loop_body
    %s18 = ssub.s32 %s13, 1
    %s19 = ssub.s32 %s13, 2
    %s20 = sadd.s32 %s13, 1
    %s21 = ssub.s32 %s13, %s20
    %p22 = scmp.eq.s32.totalorder %s21, 0
    %s24 = sadd.s32 %s23, 1
    %s25 = scalar_select %p22, %s23, %s24
    %p28 = pneg %p22
    %p29 = scmp.eq.s32.totalorder %s13, 3
    %p30 = por %p28, %p29
    %p31 = scmp.ne.s32.totalorder %s23, %s26
    %p32 = scmp.eq.s32.totalorder %s13, 0
    %p33 = por %p31, %p32
    %p34 = scmp.ne.s32.totalorder %s23, %s26
    %p35 = scmp.eq.s32.totalorder %s18, 3
    %p36 = por %p34, %p35
    %p37 = scmp.ne.s32.totalorder %s26, %s27
    %p38 = scmp.eq.s32.totalorder %s18, 0
    %p39 = por %p37, %p38
    %p40 = scmp.ne.s32.totalorder %s26, %s27
    %p41 = scmp.eq.s32.totalorder %s19, 3
    %p42 = por %p40, %p41
    %p44 = scmp.ne.s32.totalorder %s27, %s43
    %p45 = scmp.eq.s32.totalorder %s19, 0
    %p46 = por %p44, %p45
    %s48 = sadd.s32 %s47, 1
    %p51 = scmp.eq.s32.totalorder %s13, 3
    %p52 = scmp.ne.s32.totalorder %s47, %s49
    %p53 = scmp.eq.s32.totalorder %s13, 0
    %p54 = por %p52, %p53
    %p55 = scmp.ne.s32.totalorder %s47, %s49
    %p56 = scmp.eq.s32.totalorder %s18, 3
    %p57 = por %p55, %p56
    %p58 = scmp.ne.s32.totalorder %s49, %s50
    %p59 = scmp.eq.s32.totalorder %s18, 0
    %p60 = por %p58, %p59
    %p61 = scmp.ne.s32.totalorder %s49, %s50
    %p62 = scmp.eq.s32.totalorder %s19, 3
    %p63 = por %p61, %p62
    %p65 = scmp.ne.s32.totalorder %s50, %s64
    %p66 = scmp.eq.s32.totalorder %s19, 0
    %p67 = por %p65, %p66
    %s69 = sadd.s32 %s68, 1
    %p72 = scmp.eq.s32.totalorder %s13, 3
    %p73 = scmp.ne.s32.totalorder %s68, %s70
    %p74 = scmp.eq.s32.totalorder %s13, 0
    %p75 = por %p73, %p74
    %p76 = scmp.ne.s32.totalorder %s68, %s70
    %p77 = scmp.eq.s32.totalorder %s18, 3
    %p78 = por %p76, %p77
    %p79 = scmp.ne.s32.totalorder %s70, %s71
    %p80 = scmp.eq.s32.totalorder %s18, 0
    %p81 = por %p79, %p80
    %p82 = scmp.ne.s32.totalorder %s70, %s71
    %p83 = scmp.eq.s32.totalorder %s19, 3
    %p84 = por %p82, %p83
    %p86 = scmp.ne.s32.totalorder %s71, %s85
    %p87 = scmp.eq.s32.totalorder %s19, 0
    %p88 = por %p86, %p87
    %s90 = sadd.s32 %s89, 1
    %p93 = scmp.eq.s32.totalorder %s13, 3
    %p94 = scmp.ne.s32.totalorder %s89, %s91
    %p95 = scmp.eq.s32.totalorder %s13, 0
    %p96 = por %p94, %p95
    %p97 = scmp.ne.s32.totalorder %s89, %s91
    %p98 = scmp.eq.s32.totalorder %s18, 3
    %p99 = por %p97, %p98
    %p100 = scmp.ne.s32.totalorder %s91, %s92
    %p101 = scmp.eq.s32.totalorder %s18, 0
    %p102 = por %p100, %p101
    %p103 = scmp.ne.s32.totalorder %s91, %s92
    %p104 = scmp.eq.s32.totalorder %s19, 3
    %p105 = por %p103, %p104
    %p107 = scmp.ne.s32.totalorder %s92, %s106
    %p108 = scmp.eq.s32.totalorder %s19, 0
    %p109 = por %p107, %p108
    %s111 = sadd.s32 %s110, 1
    %p114 = scmp.eq.s32.totalorder %s13, 3
    %p115 = scmp.ne.s32.totalorder %s110, %s112
    %p116 = scmp.eq.s32.totalorder %s13, 0
    %p117 = por %p115, %p116
    %p118 = scmp.ne.s32.totalorder %s110, %s112
    %p119 = scmp.eq.s32.totalorder %s18, 3
    %p120 = por %p118, %p119
    %p121 = scmp.ne.s32.totalorder %s112, %s113
    %p122 = scmp.eq.s32.totalorder %s18, 0
    %p123 = por %p121, %p122
    %p124 = scmp.ne.s32.totalorder %s112, %s113
    %p125 = scmp.eq.s32.totalorder %s19, 3
    %p126 = por %p124, %p125
    %p128 = scmp.ne.s32.totalorder %s113, %s127
    %p129 = scmp.eq.s32.totalorder %s19, 0
    %p130 = por %p128, %p129
    %s132 = sadd.s32 %s131, 1
    %p135 = scmp.eq.s32.totalorder %s13, 3
    %p136 = scmp.ne.s32.totalorder %s131, %s133
    %p137 = scmp.eq.s32.totalorder %s13, 0
    %p138 = por %p136, %p137
    %p139 = scmp.ne.s32.totalorder %s131, %s133
    %p140 = scmp.eq.s32.totalorder %s18, 3
    %p141 = por %p139, %p140
    %p142 = scmp.ne.s32.totalorder %s133, %s134
    %p143 = scmp.eq.s32.totalorder %s18, 0
    %p144 = por %p142, %p143
    %p145 = scmp.ne.s32.totalorder %s133, %s134
    %p146 = scmp.eq.s32.totalorder %s19, 3
    %p147 = por %p145, %p146
    %p149 = scmp.ne.s32.totalorder %s134, %s148
    %p150 = scmp.eq.s32.totalorder %s19, 0
    %p151 = por %p149, %p150
    %s153 = sadd.s32 %s152, 1
    %p156 = scmp.eq.s32.totalorder %s13, 3
    %p157 = scmp.ne.s32.totalorder %s152, %s154
    %p158 = scmp.eq.s32.totalorder %s13, 0
    %p159 = por %p157, %p158
    %p160 = scmp.ne.s32.totalorder %s152, %s154
    %p161 = scmp.eq.s32.totalorder %s18, 3
    %p162 = por %p160, %p161
    %p163 = scmp.ne.s32.totalorder %s154, %s155
    %p164 = scmp.eq.s32.totalorder %s18, 0
    %p165 = por %p163, %p164
    %p166 = scmp.ne.s32.totalorder %s154, %s155
    %p167 = scmp.eq.s32.totalorder %s19, 3
    %p168 = por %p166, %p167
    %p170 = scmp.ne.s32.totalorder %s155, %s169
    %p171 = scmp.eq.s32.totalorder %s19, 0
    %p172 = por %p170, %p171
    %s173 = ssub.s32 %s13, %s20
    %p174 = scmp.eq.s32.totalorder %s173, 0
    %s176 = sadd.s32 %s175, 1
    %s177 = scalar_select %p174, %s175, %s176
    %p180 = pneg %p174
    %p181 = scmp.eq.s32.totalorder %s13, 3
    %p182 = por %p180, %p181
    %p183 = scmp.ne.s32.totalorder %s175, %s178
    %p184 = scmp.eq.s32.totalorder %s13, 0
    %p185 = por %p183, %p184
    %p186 = scmp.ne.s32.totalorder %s175, %s178
    %p187 = scmp.eq.s32.totalorder %s18, 3
    %p188 = por %p186, %p187
    %p189 = scmp.ne.s32.totalorder %s178, %s179
    %p190 = scmp.eq.s32.totalorder %s18, 0
    %p191 = por %p189, %p190
    %p192 = scmp.ne.s32.totalorder %s178, %s179
    %p193 = scmp.eq.s32.totalorder %s19, 3
    %p194 = por %p192, %p193
    %p196 = scmp.ne.s32.totalorder %s179, %s195
    %p197 = scmp.eq.s32.totalorder %s19, 0
    %p198 = por %p196, %p197
    %p199 = scmp.le.s32.totalorder 1, %s13
    %p200 = scmp.lt.s32.totalorder %s13, 5
    %p201 = pnand %p199, %p200
    %p202 = pneg %p201
    // Predicated region
    $region9: #{policy_net_forward.1} parent=5 // pred_check
      _
    $region10: #{policy_net_forward.1} parent=5 // pred_check_branch
      %204 = sbr.rel (%p201) target = $region12
    $region11: #{policy_net_forward.1} parent=5 // pred_region
      %s205 = ssub.s32 %s13, 1
      // Predicated region
      $region13: #{policy_net_forward.1} parent=11 // pred_check
        %p206 = pneg %p60
      $region14: #{policy_net_forward.1} parent=11 // pred_check_branch
        %208 = sbr.rel (%p206) target = $region16
      $region15: #{policy_net_forward.1} parent=11 // pred_region
        _
      $region16: #{policy_net_forward.1} parent=11 // pred_fallthru
        _
      // Predicated region
      $region17: #{policy_net_forward.1} parent=11 // pred_check
        %p209 = pneg %p81
      $region18: #{policy_net_forward.1} parent=11 // pred_check_branch
        %211 = sbr.rel (%p209) target = $region20
      $region19: #{policy_net_forward.1} parent=11 // pred_region
        _
      $region20: #{policy_net_forward.1} parent=11 // pred_fallthru
        _
      // Predicated region
      $region21: #{policy_net_forward.1} parent=11 // pred_check
        %p212 = pneg %p102
      $region22: #{policy_net_forward.1} parent=11 // pred_check_branch
        %214 = sbr.rel (%p212) target = $region24
      $region23: #{policy_net_forward.1} parent=11 // pred_region
        _
      $region24: #{policy_net_forward.1} parent=11 // pred_fallthru
        _
      // Predicated region
      $region25: #{policy_net_forward.1} parent=11 // pred_check
        %p215 = pneg %p123
      $region26: #{policy_net_forward.1} parent=11 // pred_check_branch
        %217 = sbr.rel (%p215) target = $region28
      $region27: #{policy_net_forward.1} parent=11 // pred_region
        _
      $region28: #{policy_net_forward.1} parent=11 // pred_fallthru
        _
      // Predicated region
      $region29: #{policy_net_forward.1} parent=11 // pred_check
        %p218 = pneg %p144
      $region30: #{policy_net_forward.1} parent=11 // pred_check_branch
        %220 = sbr.rel (%p218) target = $region32
      $region31: #{policy_net_forward.1} parent=11 // pred_region
        _
      $region32: #{policy_net_forward.1} parent=11 // pred_fallthru
        _
      // Predicated region
      $region33: #{policy_net_forward.1} parent=11 // pred_check
        %p221 = pneg %p165
      $region34: #{policy_net_forward.1} parent=11 // pred_check_branch
        %223 = sbr.rel (%p221) target = $region36
      $region35: #{policy_net_forward.1} parent=11 // pred_region
        _
      $region36: #{policy_net_forward.1} parent=11 // pred_fallthru
        _
    $region12: #{policy_net_forward.1} parent=5 // pred_fallthru
      _
    %p224 = scmp.lt.s32.totalorder %s13, 4
    // Predicated region
    $region37: #{policy_net_forward.1} parent=5 // pred_check
      %p225 = pneg %p224
    $region38: #{policy_net_forward.1} parent=5 // pred_check_branch
      %227 = sbr.rel (%p225) target = $region40
    $region39: #{policy_net_forward.1} parent=5 // pred_region
      // Predicated region
      $region41: #{policy_net_forward.1} parent=39 // pred_check
        %p228 = pneg %p33
      $region42: #{policy_net_forward.1} parent=39 // pred_check_branch
        %230 = sbr.rel (%p228) target = $region44
      $region43: #{policy_net_forward.1} parent=39 // pred_region
        %s231 = smul.u32 16, %s13
        %p232 = scmp.lt.s32.totalorder %s231, 63
        %s233 = scalar_select %p232, %s231, 63
        %s234 = smul.addr %s233, 4
        %s235 = scalar_lea.vmem %s0, %s234
        %s236 = smul.u32 16, %s13
      $region44: #{policy_net_forward.1} parent=39 // pred_fallthru
        _
    $region40: #{policy_net_forward.1} parent=5 // pred_fallthru
      _
    %p237 = scmp.le.s32.totalorder 1, %s13
    %p238 = scmp.lt.s32.totalorder %s13, 5
    %p239 = pnand %p237, %p238
    %p240 = pneg %p239
    // Predicated region
    $region45: #{policy_net_forward.1} parent=5 // pred_check
      _
    $region46: #{policy_net_forward.1} parent=5 // pred_check_branch
      %242 = sbr.rel (%p239) target = $region48
    $region47: #{policy_net_forward.1} parent=5 // pred_region
      %s243 = ssub.s32 %s13, 1
      %s244 = smul.u32 16, %s18
      %p245 = scmp.lt.s32.totalorder %s244, 63
      %s246 = scalar_select %p245, %s244, 63
      %s247 = smul.addr %s246, 4
      %s248 = scalar_lea.vmem %s0, %s247
      %p249 = pneg %p39
      %p250 = pneg %p36
      %p251 = pneg %p60
      %p252 = pneg %p57
      %p253 = pneg %p81
      %p254 = pneg %p78
      %p255 = pneg %p102
      %p256 = pneg %p99
      %p257 = pneg %p123
      %p258 = pneg %p120
      %p259 = pneg %p144
      %p260 = pneg %p141
      %p261 = pneg %p165
      %p262 = pneg %p162
      %p263 = pneg %p191
      %p264 = pneg %p188
      %s265 = smul.u32 16, %s18
      %p266 = scmp.lt.s32.totalorder %s265, 63
      %s267 = scalar_select %p266, %s265, 63
      %s268 = smul.addr %s267, 8
      %s269 = scalar_lea.vmem %s7, %s268
      %s270 = smul.u32 16, %s18
      %p271 = scmp.lt.s32.totalorder %s270, 63
      %s272 = scalar_select %p271, %s270, 63
      %s273 = smul.addr %s272, 4
      %s274 = scalar_lea.vmem %s0, %s273
      %s275 = smul.u32 16, %s18
      %s276 = smul.u32 16, %s18
      %p277 = scmp.lt.s32.totalorder %s276, 63
      %s278 = scalar_select %p277, %s276, 63
      %s279 = smul.addr %s278, 8
      %s280 = scalar_lea.vmem %s7, %s279
      %s281 = smul.u32 16, %s18
      %v283 = vld [vmem:[%s274] sm:$0xf]
      %v284 = vld [vmem:[%s274 + $0x4] sm:$0xf]
      %v285 = vld [vmem:[%s274 + $0x8] sm:$0xf]
      %v286 = vld [vmem:[%s274 + $0xc] sm:$0xf]
      %v287 = vld [vmem:[%s274 + $0x10] sm:$0xf]
      %v288 = vld [vmem:[%s274 + $0x14] sm:$0xf]
      %v289 = vld [vmem:[%s274 + $0x18] sm:$0xf]
      %v290 = vld [vmem:[%s274 + $0x1c] sm:$0xf]
      %v291 = vld [vmem:[%s274 + $0x20] sm:$0xf]
      %v292 = vld [vmem:[%s274 + $0x24] sm:$0xf]
      %v293 = vld [vmem:[%s274 + $0x28] sm:$0xf]
      %v294 = vld [vmem:[%s274 + $0x2c] sm:$0xf]
      %v295 = vld [vmem:[%s274 + $0x30] sm:$0xf]
      %v296 = vld [vmem:[%s274 + $0x34] sm:$0xf]
      %v297 = vld [vmem:[%s274 + $0x38] sm:$0xf]
      %v298 = vld [vmem:[%s274 + $0x3c] sm:$0xf]
      %v299 = vld [vmem:[%s1] sm:$0x3]
      %v300 = vld [vmem:[%s2] sm:$0x1]
      %v302 = vlaneseq
      %v303 = vshrl.u32 %v302, 7
      %v304 = vsub.s32 0, %v303
      %v305 = vrot.slane %v300, %v304
      %v323 = vunpack.c.l.b16 %v283
      %v324 = vunpack.c.l.b16 %v284
      %v325 = vunpack.c.l.b16 %v285
      %v326 = vunpack.c.l.b16 %v286
      %v327 = vunpack.c.l.b16 %v287
      %v328 = vunpack.c.l.b16 %v288
      %v329 = vunpack.c.l.b16 %v289
      %v330 = vunpack.c.l.b16 %v290
      %v331 = vunpack.c.l.b16 %v291
      %v332 = vunpack.c.l.b16 %v292
      %v333 = vunpack.c.l.b16 %v293
      %v334 = vunpack.c.l.b16 %v294
      %v335 = vunpack.c.l.b16 %v295
      %v336 = vunpack.c.l.b16 %v296
      %v337 = vunpack.c.l.b16 %v297
      %v338 = vunpack.c.l.b16 %v298
      %v339 = vpack.c.b16 %v324, %v323
      %v340 = vpack.c.b16 %v326, %v325
      %v341 = vpack.c.b16 %v328, %v327
      %v342 = vpack.c.b16 %v330, %v329
      %v343 = vpack.c.b16 %v332, %v331
      %v344 = vpack.c.b16 %v334, %v333
      %v345 = vpack.c.b16 %v336, %v335
      %v346 = vpack.c.b16 %v338, %v337
      %vm347 = vcmask 31744
      %v349 = vsel %vm347, %v339, 0
      %v352 = vsel %vm347, %v340, 0
      %v355 = vsel %vm347, %v341, 0
      %v358 = vsel %vm347, %v342, 0
      %v361 = vsel %vm347, %v343, 0
      %v364 = vsel %vm347, %v344, 0
      %v367 = vsel %vm347, %v345, 0
      %v370 = vsel %vm347, %v346, 0
      %vm372 = vcmask 1041408
      %v374 = vsel %vm372, %v299, 0
      %376 = vmatprep.subr.bf16.mxu0 0
      %377 = vmatpush1.bf16.msra.mxu0 %v374
      %378 = vmatprep.subr.bf16.mxu0 0
      %379 = vmatpush1.bf16.msra.mxu0 0
      %380 = vmatprep.subr.bf16.mxu0 0
      %381 = vmatpush1.bf16.msra.mxu0 0
      %382 = vmatprep.subr.bf16.mxu0 0
      %383 = vmatpush1.bf16.msra.mxu0 0
      %384 = vmatprep.subr.bf16.mxu0 0
      %385 = vmatpush1.bf16.msra.mxu0 0
      %386 = vmatprep.subr.bf16.mxu0 0
      %387 = vmatpush1.bf16.msra.mxu0 0
      %388 = vmatprep.subr.bf16.mxu0 0
      %389 = vmatpush1.bf16.msra.mxu0 0
      %390 = vmatprep.subr.bf16.mxu0 0
      %391 = vmatpush1.bf16.msra.mxu0 0
      %392 = vmatprep.subr.bf16.mxu0 0
      %393 = vmatpush1.bf16.msra.mxu0 0
      %394 = vmatprep.subr.bf16.mxu0 0
      %395 = vmatpush1.bf16.msra.mxu0 0
      %396 = vmatprep.subr.bf16.mxu0 0
      %397 = vmatpush1.bf16.msra.mxu0 0
      %398 = vmatprep.subr.bf16.mxu0 0
      %399 = vmatpush1.bf16.msra.mxu0 0
      %400 = vmatprep.subr.bf16.mxu0 0
      %401 = vmatpush1.bf16.msra.mxu0 0
      %402 = vmatprep.subr.bf16.mxu0 0
      %403 = vmatpush1.bf16.msra.mxu0 0
      %404 = vmatprep.subr.bf16.mxu0 0
      %405 = vmatpush1.bf16.msra.mxu0 0
      %406 = vmatprep.subr.bf16.mxu0 0
      %407 = vmatpush1.bf16.msra.mxu0 0
      %408 = vmatprep.mubr.bf16.mxu0 0
      %409 = vmatmul.mubr.bf16.gmra.mrb[0].mxu0 %v349
      %v410 = vpop.f32.mrb[0].mxu0
      %v411 = vadd.f32 %v305, %v410
      %v412 = vpop.f32.mrb[0].mxu0
      %v413 = vpop.f32.mrb[0].mxu0
      %v414 = vadd.f32 %v305, %v413
      %v415 = vpop.f32.mrb[0].mxu0
      %416 = vmatprep.mubr.bf16.mxu0 0
      %417 = vmatmul.mubr.bf16.gmra.mrb[0].mxu0 %v352
      %v418 = vpop.f32.mrb[0].mxu0
      %v419 = vadd.f32 %v305, %v418
      %v420 = vpop.f32.mrb[0].mxu0
      %v421 = vpop.f32.mrb[0].mxu0
      %v422 = vadd.f32 %v305, %v421
      %v423 = vpop.f32.mrb[0].mxu0
      %424 = vmatprep.mubr.bf16.mxu0 0
      %425 = vmatmul.mubr.bf16.gmra.mrb[0].mxu0 %v355
      %v426 = vpop.f32.mrb[0].mxu0
      %v427 = vadd.f32 %v305, %v426
      %v428 = vpop.f32.mrb[0].mxu0
      %v429 = vpop.f32.mrb[0].mxu0
      %v430 = vadd.f32 %v305, %v429
      %v431 = vpop.f32.mrb[0].mxu0
      %432 = vmatprep.mubr.bf16.mxu0 0
      %433 = vmatmul.mubr.bf16.gmra.mrb[0].mxu0 %v358
      %v434 = vpop.f32.mrb[0].mxu0
      %v435 = vadd.f32 %v305, %v434
      %v436 = vpop.f32.mrb[0].mxu0
      %v437 = vpop.f32.mrb[0].mxu0
      %v438 = vadd.f32 %v305, %v437
      %v439 = vpop.f32.mrb[0].mxu0
      %440 = vmatprep.mubr.bf16.mxu0 0
      %441 = vmatmul.mubr.bf16.gmra.mrb[0].mxu0 %v361
      %v442 = vpop.f32.mrb[0].mxu0
      %v443 = vadd.f32 %v305, %v442
      %v444 = vpop.f32.mrb[0].mxu0
      %v445 = vpop.f32.mrb[0].mxu0
      %v446 = vadd.f32 %v305, %v445
      %v447 = vpop.f32.mrb[0].mxu0
      %448 = vmatprep.mubr.bf16.mxu0 0
      %449 = vmatmul.mubr.bf16.gmra.mrb[0].mxu0 %v364
      %v450 = vpop.f32.mrb[0].mxu0
      %v451 = vadd.f32 %v305, %v450
      %v452 = vpop.f32.mrb[0].mxu0
      %v453 = vpop.f32.mrb[0].mxu0
      %v454 = vadd.f32 %v305, %v453
      %v455 = vpop.f32.mrb[0].mxu0
      %456 = vmatprep.mubr.bf16.mxu0 0
      %457 = vmatmul.mubr.bf16.gmra.mrb[0].mxu0 %v367
      %v458 = vpop.f32.mrb[0].mxu0
      %v459 = vadd.f32 %v305, %v458
      %v460 = vpop.f32.mrb[0].mxu0
      %v461 = vpop.f32.mrb[0].mxu0
      %v462 = vadd.f32 %v305, %v461
      %v463 = vpop.f32.mrb[0].mxu0
      %464 = vmatprep.mubr.bf16.mxu0 0
      %465 = vmatmul.mubr.bf16.gmra.mrb[0].mxu0 %v370
      %v466 = vpop.f32.mrb[0].mxu0
      %v467 = vadd.f32 %v305, %v466
      %v468 = vpop.f32.mrb[0].mxu0
      %v469 = vpop.f32.mrb[0].mxu0
      %v470 = vadd.f32 %v305, %v469
      %v471 = vpop.f32.mrb[0].mxu0
      %472 = vdwg.mxu0
      %v473 = vmax.f32 %v411, 0.0
      %v474 = vmax.f32 %v414, 0.0
      %v475 = vmax.f32 %v419, 0.0
      %v476 = vmax.f32 %v422, 0.0
      %v477 = vmax.f32 %v427, 0.0
      %v478 = vmax.f32 %v430, 0.0
      %v479 = vmax.f32 %v435, 0.0
      %v480 = vmax.f32 %v438, 0.0
      %v481 = vmax.f32 %v443, 0.0
      %v482 = vmax.f32 %v446, 0.0
      %v483 = vmax.f32 %v451, 0.0
      %v484 = vmax.f32 %v454, 0.0
      %v485 = vmax.f32 %v459, 0.0
      %v486 = vmax.f32 %v462, 0.0
      %v487 = vmax.f32 %v467, 0.0
      %v488 = vmax.f32 %v470, 0.0
      %v489 = vpack.c.bf16 %v474, %v473
      %v490 = vpack.c.bf16 %v476, %v475
      %v491 = vpack.c.bf16 %v478, %v477
      %v492 = vpack.c.bf16 %v480, %v479
      %v493 = vpack.c.bf16 %v482, %v481
      %v494 = vpack.c.bf16 %v484, %v483
      %v495 = vpack.c.bf16 %v486, %v485
      %v496 = vpack.c.bf16 %v488, %v487
      %v497 = vld [vmem:[%s3] sm:$0xf]
      %v498 = vld [vmem:[%s3 + $0x4] sm:$0xf]
      %v499 = vld [vmem:[%s3 + $0x8] sm:$0xf]
      %v500 = vld [vmem:[%s3 + $0xc] sm:$0xf]
      %v501 = vld [vmem:[%s3 + $0x10] sm:$0xf]
      %v502 = vld [vmem:[%s3 + $0x14] sm:$0xf]
      %v503 = vld [vmem:[%s3 + $0x18] sm:$0xf]
      %v504 = vld [vmem:[%s3 + $0x1c] sm:$0xf]
      %v505 = vld [vmem:[%s3 + $0x20] sm:$0xf]
      %v506 = vld [vmem:[%s3 + $0x24] sm:$0xf]
      %v507 = vld [vmem:[%s3 + $0x28] sm:$0xf]
      %v508 = vld [vmem:[%s3 + $0x2c] sm:$0xf]
      %v509 = vld [vmem:[%s3 + $0x30] sm:$0xf]
      %v510 = vld [vmem:[%s3 + $0x34] sm:$0xf]
      %v511 = vld [vmem:[%s3 + $0x38] sm:$0xf]
      %v512 = vld [vmem:[%s3 + $0x3c] sm:$0xf]
      %v513 = vld [vmem:[%s4] sm:$0x1]
      %v515 = vlaneseq
      %v516 = vshrl.u32 %v515, 7
      %v517 = vsub.s32 0, %v516
      %v518 = vrot.slane %v513, %v517
      %v536 = vunpack.c.l.b16 %v497
      %v537 = vunpack.c.l.b16 %v498
      %v538 = vunpack.c.l.b16 %v499
      %v539 = vunpack.c.l.b16 %v500
      %v540 = vunpack.c.l.b16 %v501
      %v541 = vunpack.c.l.b16 %v502
      %v542 = vunpack.c.l.b16 %v503
      %v543 = vunpack.c.l.b16 %v504
      %v544 = vunpack.c.l.b16 %v505
      %v545 = vunpack.c.l.b16 %v506
      %v546 = vunpack.c.l.b16 %v507
      %v547 = vunpack.c.l.b16 %v508
      %v548 = vunpack.c.l.b16 %v509
      %v549 = vunpack.c.l.b16 %v510
      %v550 = vunpack.c.l.b16 %v511
      %v551 = vunpack.c.l.b16 %v512
      %v552 = vpack.c.b16 %v537, %v536
      %v553 = vpack.c.b16 %v539, %v538
      %v554 = vpack.c.b16 %v541, %v540
      %v555 = vpack.c.b16 %v543, %v542
      %v556 = vpack.c.b16 %v545, %v544
      %v557 = vpack.c.b16 %v547, %v546
      %v558 = vpack.c.b16 %v549, %v548
      %v559 = vpack.c.b16 %v551, %v550
      %568 = vmatprep.subr.bf16.mxu0 0
      %569 = vmatpush1.bf16.msra.mxu0 %v552
      %570 = vmatprep.subr.bf16.mxu0 0
      %571 = vmatpush1.bf16.msra.mxu0 %v553
      %572 = vmatprep.subr.bf16.mxu0 0
      %573 = vmatpush1.bf16.msra.mxu0 %v554
      %574 = vmatprep.subr.bf16.mxu0 0
      %575 = vmatpush1.bf16.msra.mxu0 %v555
      %576 = vmatprep.subr.bf16.mxu0 0
      %577 = vmatpush1.bf16.msra.mxu0 %v556
      %578 = vmatprep.subr.bf16.mxu0 0
      %579 = vmatpush1.bf16.msra.mxu0 %v557
      %580 = vmatprep.subr.bf16.mxu0 0
      %581 = vmatpush1.bf16.msra.mxu0 %v558
      %582 = vmatprep.subr.bf16.mxu0 0
      %583 = vmatpush1.bf16.msra.mxu0 %v559
      %584 = vmatprep.subr.bf16.mxu0 0
      %585 = vmatpush1.bf16.msra.mxu0 0
      %586 = vmatprep.subr.bf16.mxu0 0
      %587 = vmatpush1.bf16.msra.mxu0 0
      %588 = vmatprep.subr.bf16.mxu0 0
      %589 = vmatpush1.bf16.msra.mxu0 0
      %590 = vmatprep.subr.bf16.mxu0 0
      %591 = vmatpush1.bf16.msra.mxu0 0
      %592 = vmatprep.subr.bf16.mxu0 0
      %593 = vmatpush1.bf16.msra.mxu0 0
      %594 = vmatprep.subr.bf16.mxu0 0
      %595 = vmatpush1.bf16.msra.mxu0 0
      %596 = vmatprep.subr.bf16.mxu0 0
      %597 = vmatpush1.bf16.msra.mxu0 0
      %598 = vmatprep.subr.bf16.mxu0 0
      %599 = vmatpush1.bf16.msra.mxu0 0
      %600 = vmatprep.mubr.bf16.mxu0 0
      %601 = vmatmul.mubr.bf16.gmra.mrb[0].mxu0 %v489
      %v602 = vpop.f32.mrb[0].mxu0
      %v603 = vadd.f32 %v518, %v602
      %v604 = vpop.f32.mrb[0].mxu0
      %v605 = vpop.f32.mrb[0].mxu0
      %v606 = vadd.f32 %v518, %v605
      %v607 = vpop.f32.mrb[0].mxu0
      %608 = vmatprep.mubr.bf16.mxu0 0
      %609 = vmatmul.mubr.bf16.gmra.mrb[0].mxu0 %v490
      %v610 = vpop.f32.mrb[0].mxu0
      %v611 = vadd.f32 %v518, %v610
      %v612 = vpop.f32.mrb[0].mxu0
      %v613 = vpop.f32.mrb[0].mxu0
      %v614 = vadd.f32 %v518, %v613
      %v615 = vpop.f32.mrb[0].mxu0
      %616 = vmatprep.mubr.bf16.mxu0 0
      %617 = vmatmul.mubr.bf16.gmra.mrb[0].mxu0 %v491
      %v618 = vpop.f32.mrb[0].mxu0
      %v619 = vadd.f32 %v518, %v618
      %v620 = vpop.f32.mrb[0].mxu0
      %v621 = vpop.f32.mrb[0].mxu0
      %v622 = vadd.f32 %v518, %v621
      %v623 = vpop.f32.mrb[0].mxu0
      %624 = vmatprep.mubr.bf16.mxu0 0
      %625 = vmatmul.mubr.bf16.gmra.mrb[0].mxu0 %v492
      %v626 = vpop.f32.mrb[0].mxu0
      %v627 = vadd.f32 %v518, %v626
      %v628 = vpop.f32.mrb[0].mxu0
      %v629 = vpop.f32.mrb[0].mxu0
      %v630 = vadd.f32 %v518, %v629
      %v631 = vpop.f32.mrb[0].mxu0
      %632 = vmatprep.mubr.bf16.mxu0 0
      %633 = vmatmul.mubr.bf16.gmra.mrb[0].mxu0 %v493
      %v634 = vpop.f32.mrb[0].mxu0
      %v635 = vadd.f32 %v518, %v634
      %v636 = vpop.f32.mrb[0].mxu0
      %v637 = vpop.f32.mrb[0].mxu0
      %v638 = vadd.f32 %v518, %v637
      %v639 = vpop.f32.mrb[0].mxu0
      %640 = vmatprep.mubr.bf16.mxu0 0
      %641 = vmatmul.mubr.bf16.gmra.mrb[0].mxu0 %v494
      %v642 = vpop.f32.mrb[0].mxu0
      %v643 = vadd.f32 %v518, %v642
      %v644 = vpop.f32.mrb[0].mxu0
      %v645 = vpop.f32.mrb[0].mxu0
      %v646 = vadd.f32 %v518, %v645
      %v647 = vpop.f32.mrb[0].mxu0
      %648 = vmatprep.mubr.bf16.mxu0 0
      %649 = vmatmul.mubr.bf16.gmra.mrb[0].mxu0 %v495
      %v650 = vpop.f32.mrb[0].mxu0
      %v651 = vadd.f32 %v518, %v650
      %v652 = vpop.f32.mrb[0].mxu0
      %v653 = vpop.f32.mrb[0].mxu0
      %v654 = vadd.f32 %v518, %v653
      %v655 = vpop.f32.mrb[0].mxu0
      %656 = vmatprep.mubr.bf16.mxu0 0
      %657 = vmatmul.mubr.bf16.gmra.mrb[0].mxu0 %v496
      %v658 = vpop.f32.mrb[0].mxu0
      %v659 = vadd.f32 %v518, %v658
      %v660 = vpop.f32.mrb[0].mxu0
      %v661 = vpop.f32.mrb[0].mxu0
      %v662 = vadd.f32 %v518, %v661
      %v663 = vpop.f32.mrb[0].mxu0
      %664 = vdwg.mxu0
      %v665 = vmax.f32 %v603, 0.0
      %v666 = vmax.f32 %v606, 0.0
      %v667 = vmax.f32 %v611, 0.0
      %v668 = vmax.f32 %v614, 0.0
      %v669 = vmax.f32 %v619, 0.0
      %v670 = vmax.f32 %v622, 0.0
      %v671 = vmax.f32 %v627, 0.0
      %v672 = vmax.f32 %v630, 0.0
      %v673 = vmax.f32 %v635, 0.0
      %v674 = vmax.f32 %v638, 0.0
      %v675 = vmax.f32 %v643, 0.0
      %v676 = vmax.f32 %v646, 0.0
      %v677 = vmax.f32 %v651, 0.0
      %v678 = vmax.f32 %v654, 0.0
      %v679 = vmax.f32 %v659, 0.0
      %v680 = vmax.f32 %v662, 0.0
      %v681 = vpack.c.bf16 %v666, %v665
      %v682 = vpack.c.bf16 %v668, %v667
      %v683 = vpack.c.bf16 %v670, %v669
      %v684 = vpack.c.bf16 %v672, %v671
      %v685 = vpack.c.bf16 %v674, %v673
      %v686 = vpack.c.bf16 %v676, %v675
      %v687 = vpack.c.bf16 %v678, %v677
      %v688 = vpack.c.bf16 %v680, %v679
      %v689 = vld [vmem:[%s5] sm:$0xf]
      %v690 = vld [vmem:[%s5 + $0x4] sm:$0xf]
      %v691 = vld [vmem:[%s5 + $0x8] sm:$0xf]
      %v692 = vld [vmem:[%s5 + $0xc] sm:$0xf]
      %v693 = vld [vmem:[%s5 + $0x10] sm:$0xf]
      %v694 = vld [vmem:[%s5 + $0x14] sm:$0xf]
      %v695 = vld [vmem:[%s5 + $0x18] sm:$0xf]
      %v696 = vld [vmem:[%s5 + $0x1c] sm:$0xf]
      %v697 = vld [vmem:[%s5 + $0x20] sm:$0xf]
      %v698 = vld [vmem:[%s5 + $0x24] sm:$0xf]
      %v699 = vld [vmem:[%s5 + $0x28] sm:$0xf]
      %v700 = vld [vmem:[%s5 + $0x2c] sm:$0xf]
      %v701 = vld [vmem:[%s5 + $0x30] sm:$0xf]
      %v702 = vld [vmem:[%s5 + $0x34] sm:$0xf]
      %v703 = vld [vmem:[%s5 + $0x38] sm:$0xf]
      %v704 = vld [vmem:[%s5 + $0x3c] sm:$0xf]
      %v705 = vld [vmem:[%s6] sm:$0x1]
      %v707 = vlaneseq
      %v708 = vshrl.u32 %v707, 7
      %v709 = vsub.s32 0, %v708
      %v710 = vrot.slane %v705, %v709
      %v728 = vunpack.c.l.b16 %v689
      %v729 = vunpack.c.l.b16 %v690
      %v730 = vunpack.c.l.b16 %v691
      %v731 = vunpack.c.l.b16 %v692
      %v732 = vunpack.c.l.b16 %v693
      %v733 = vunpack.c.l.b16 %v694
      %v734 = vunpack.c.l.b16 %v695
      %v735 = vunpack.c.l.b16 %v696
      %v736 = vunpack.c.l.b16 %v697
      %v737 = vunpack.c.l.b16 %v698
      %v738 = vunpack.c.l.b16 %v699
      %v739 = vunpack.c.l.b16 %v700
      %v740 = vunpack.c.l.b16 %v701
      %v741 = vunpack.c.l.b16 %v702
      %v742 = vunpack.c.l.b16 %v703
      %v743 = vunpack.c.l.b16 %v704
      %v744 = vpack.c.b16 %v729, %v728
      %v745 = vpack.c.b16 %v731, %v730
      %v746 = vpack.c.b16 %v733, %v732
      %v747 = vpack.c.b16 %v735, %v734
      %v748 = vpack.c.b16 %v737, %v736
      %v749 = vpack.c.b16 %v739, %v738
      %v750 = vpack.c.b16 %v741, %v740
      %v751 = vpack.c.b16 %v743, %v742
      %760 = vmatprep.subr.bf16.mxu0 0
      %761 = vmatpush1.bf16.msra.mxu0 %v744
      %762 = vmatprep.subr.bf16.mxu0 0
      %763 = vmatpush1.bf16.msra.mxu0 %v745
      %764 = vmatprep.subr.bf16.mxu0 0
      %765 = vmatpush1.bf16.msra.mxu0 %v746
      %766 = vmatprep.subr.bf16.mxu0 0
      %767 = vmatpush1.bf16.msra.mxu0 %v747
      %768 = vmatprep.subr.bf16.mxu0 0
      %769 = vmatpush1.bf16.msra.mxu0 %v748
      %770 = vmatprep.subr.bf16.mxu0 0
      %771 = vmatpush1.bf16.msra.mxu0 %v749
      %772 = vmatprep.subr.bf16.mxu0 0
      %773 = vmatpush1.bf16.msra.mxu0 %v750
      %774 = vmatprep.subr.bf16.mxu0 0
      %775 = vmatpush1.bf16.msra.mxu0 %v751
      %776 = vmatprep.subr.bf16.mxu0 0
      %777 = vmatpush1.bf16.msra.mxu0 0
      %778 = vmatprep.subr.bf16.mxu0 0
      %779 = vmatpush1.bf16.msra.mxu0 0
      %780 = vmatprep.subr.bf16.mxu0 0
      %781 = vmatpush1.bf16.msra.mxu0 0
      %782 = vmatprep.subr.bf16.mxu0 0
      %783 = vmatpush1.bf16.msra.mxu0 0
      %784 = vmatprep.subr.bf16.mxu0 0
      %785 = vmatpush1.bf16.msra.mxu0 0
      %786 = vmatprep.subr.bf16.mxu0 0
      %787 = vmatpush1.bf16.msra.mxu0 0
      %788 = vmatprep.subr.bf16.mxu0 0
      %789 = vmatpush1.bf16.msra.mxu0 0
      %790 = vmatprep.subr.bf16.mxu0 0
      %791 = vmatpush1.bf16.msra.mxu0 0
      %792 = vmatprep.mubr.bf16.mxu0 0
      %793 = vmatmul.mubr.bf16.gmra.mrb[0].mxu0 %v681
      %v794 = vpop.f32.mrb[0].mxu0
      %v795 = vadd.f32 %v710, %v794
      %v796 = vpop.f32.mrb[0].mxu0
      %v797 = vpop.f32.mrb[0].mxu0
      %v798 = vadd.f32 %v710, %v797
      %v799 = vpop.f32.mrb[0].mxu0
      %800 = vmatprep.mubr.bf16.mxu0 0
      %801 = vmatmul.mubr.bf16.gmra.mrb[0].mxu0 %v682
      %v802 = vpop.f32.mrb[0].mxu0
      %v803 = vadd.f32 %v710, %v802
      %v804 = vpop.f32.mrb[0].mxu0
      %v805 = vpop.f32.mrb[0].mxu0
      %v806 = vadd.f32 %v710, %v805
      %v807 = vpop.f32.mrb[0].mxu0
      %808 = vmatprep.mubr.bf16.mxu0 0
      %809 = vmatmul.mubr.bf16.gmra.mrb[0].mxu0 %v683
      %v810 = vpop.f32.mrb[0].mxu0
      %v811 = vadd.f32 %v710, %v810
      %v812 = vpop.f32.mrb[0].mxu0
      %v813 = vpop.f32.mrb[0].mxu0
      %v814 = vadd.f32 %v710, %v813
      %v815 = vpop.f32.mrb[0].mxu0
      %816 = vmatprep.mubr.bf16.mxu0 0
      %817 = vmatmul.mubr.bf16.gmra.mrb[0].mxu0 %v684
      %v818 = vpop.f32.mrb[0].mxu0
      %v819 = vadd.f32 %v710, %v818
      %v820 = vpop.f32.mrb[0].mxu0
      %v821 = vpop.f32.mrb[0].mxu0
      %v822 = vadd.f32 %v710, %v821
      %v823 = vpop.f32.mrb[0].mxu0
      %824 = vmatprep.mubr.bf16.mxu0 0
      %825 = vmatmul.mubr.bf16.gmra.mrb[0].mxu0 %v685
      %v826 = vpop.f32.mrb[0].mxu0
      %v827 = vadd.f32 %v710, %v826
      %v828 = vpop.f32.mrb[0].mxu0
      %v829 = vpop.f32.mrb[0].mxu0
      %v830 = vadd.f32 %v710, %v829
      %v831 = vpop.f32.mrb[0].mxu0
      %832 = vmatprep.mubr.bf16.mxu0 0
      %833 = vmatmul.mubr.bf16.gmra.mrb[0].mxu0 %v686
      %v834 = vpop.f32.mrb[0].mxu0
      %v835 = vadd.f32 %v710, %v834
      %v836 = vpop.f32.mrb[0].mxu0
      %v837 = vpop.f32.mrb[0].mxu0
      %v838 = vadd.f32 %v710, %v837
      %v839 = vpop.f32.mrb[0].mxu0
      %840 = vmatprep.mubr.bf16.mxu0 0
      %841 = vmatmul.mubr.bf16.gmra.mrb[0].mxu0 %v687
      %v842 = vpop.f32.mrb[0].mxu0
      %v843 = vadd.f32 %v710, %v842
      %v844 = vpop.f32.mrb[0].mxu0
      %v845 = vpop.f32.mrb[0].mxu0
      %v846 = vadd.f32 %v710, %v845
      %v847 = vpop.f32.mrb[0].mxu0
      %848 = vmatprep.mubr.bf16.mxu0 0
      %849 = vmatmul.mubr.bf16.gmra.mrb[0].mxu0 %v688
      %v850 = vpop.f32.mrb[0].mxu0
      %v851 = vadd.f32 %v710, %v850
      %v852 = vpop.f32.mrb[0].mxu0
      %v853 = vpop.f32.mrb[0].mxu0
      %v854 = vadd.f32 %v710, %v853
      %v855 = vpop.f32.mrb[0].mxu0
      %856 = vdwg.mxu0
      %v857 = vlaneseq
      %v858 = vand.u32 %v857, 127
      %vm859 = vcmp.lt.s32.totalorder %v858, 2
      %v860 = vsel %vm859, %v795, -1e+30
      %v861 = vsel %vm859, %v798, -1e+30
      %v862 = vsel %vm859, %v803, -1e+30
      %v863 = vsel %vm859, %v806, -1e+30
      %v864 = vsel %vm859, %v811, -1e+30
      %v865 = vsel %vm859, %v814, -1e+30
      %v866 = vsel %vm859, %v819, -1e+30
      %v867 = vsel %vm859, %v822, -1e+30
      %v868 = vsel %vm859, %v827, -1e+30
      %v869 = vsel %vm859, %v830, -1e+30
      %v870 = vsel %vm859, %v835, -1e+30
      %v871 = vsel %vm859, %v838, -1e+30
      %v872 = vsel %vm859, %v843, -1e+30
      %v873 = vsel %vm859, %v846, -1e+30
      %v874 = vsel %vm859, %v851, -1e+30
      %v875 = vsel %vm859, %v854, -1e+30
      %876 = vmax.xlane.f32.xlu0 %v860
      %v877 = vpop.xlane.xlu0 %876
      %878 = vmax.xlane.f32.xlu0 %v861
      %v879 = vpop.xlane.xlu0 %878
      %880 = vmax.xlane.f32.xlu0 %v862
      %v881 = vpop.xlane.xlu0 %880
      %882 = vmax.xlane.f32.xlu0 %v863
      %v883 = vpop.xlane.xlu0 %882
      %884 = vmax.xlane.f32.xlu0 %v864
      %v885 = vpop.xlane.xlu0 %884
      %886 = vmax.xlane.f32.xlu0 %v865
      %v887 = vpop.xlane.xlu0 %886
      %888 = vmax.xlane.f32.xlu0 %v866
      %v889 = vpop.xlane.xlu0 %888
      %890 = vmax.xlane.f32.xlu0 %v867
      %v891 = vpop.xlane.xlu0 %890
      %892 = vmax.xlane.f32.xlu0 %v868
      %v893 = vpop.xlane.xlu0 %892
      %894 = vmax.xlane.f32.xlu0 %v869
      %v895 = vpop.xlane.xlu0 %894
      %896 = vmax.xlane.f32.xlu0 %v870
      %v897 = vpop.xlane.xlu0 %896
      %898 = vmax.xlane.f32.xlu0 %v871
      %v899 = vpop.xlane.xlu0 %898
      %900 = vmax.xlane.f32.xlu0 %v872
      %v901 = vpop.xlane.xlu0 %900
      %902 = vmax.xlane.f32.xlu0 %v873
      %v903 = vpop.xlane.xlu0 %902
      %904 = vmax.xlane.f32.xlu0 %v874
      %v905 = vpop.xlane.xlu0 %904
      %906 = vmax.xlane.f32.xlu0 %v875
      %v907 = vpop.xlane.xlu0 %906
      %v908 = vsub.f32 %v860, %v877
      %v909 = vsub.f32 %v861, %v879
      %v910 = vsub.f32 %v862, %v881
      %v911 = vsub.f32 %v863, %v883
      %v912 = vsub.f32 %v864, %v885
      %v913 = vsub.f32 %v865, %v887
      %v914 = vsub.f32 %v866, %v889
      %v915 = vsub.f32 %v867, %v891
      %v916 = vsub.f32 %v868, %v893
      %v917 = vsub.f32 %v869, %v895
      %v918 = vsub.f32 %v870, %v897
      %v919 = vsub.f32 %v871, %v899
      %v920 = vsub.f32 %v872, %v901
      %v921 = vsub.f32 %v873, %v903
      %v922 = vsub.f32 %v874, %v905
      %v923 = vsub.f32 %v875, %v907
      %v924 = vmul.f32 %v908, 1.442695
      %v925 = vpow.pop %v924
      %v926 = vmul.f32 %v909, 1.442695
      %v927 = vpow.pop %v926
      %v928 = vmul.f32 %v910, 1.442695
      %v929 = vpow.pop %v928
      %v930 = vmul.f32 %v911, 1.442695
      %v931 = vpow.pop %v930
      %v932 = vmul.f32 %v912, 1.442695
      %v933 = vpow.pop %v932
      %v934 = vmul.f32 %v913, 1.442695
      %v935 = vpow.pop %v934
      %v936 = vmul.f32 %v914, 1.442695
      %v937 = vpow.pop %v936
      %v938 = vmul.f32 %v915, 1.442695
      %v939 = vpow.pop %v938
      %v940 = vmul.f32 %v916, 1.442695
      %v941 = vpow.pop %v940
      %v942 = vmul.f32 %v917, 1.442695
      %v943 = vpow.pop %v942
      %v944 = vmul.f32 %v918, 1.442695
      %v945 = vpow.pop %v944
      %v946 = vmul.f32 %v919, 1.442695
      %v947 = vpow.pop %v946
      %v948 = vmul.f32 %v920, 1.442695
      %v949 = vpow.pop %v948
      %v950 = vmul.f32 %v921, 1.442695
      %v951 = vpow.pop %v950
      %v952 = vmul.f32 %v922, 1.442695
      %v953 = vpow.pop %v952
      %v954 = vmul.f32 %v923, 1.442695
      %v955 = vpow.pop %v954
      %956 = vadd.xlane.f32.xlu0 %v925
      %v957 = vpop.xlane.xlu0 %956
      %958 = vadd.xlane.f32.xlu0 %v927
      %v959 = vpop.xlane.xlu0 %958
      %960 = vadd.xlane.f32.xlu0 %v929
      %v961 = vpop.xlane.xlu0 %960
      %962 = vadd.xlane.f32.xlu0 %v931
      %v963 = vpop.xlane.xlu0 %962
      %964 = vadd.xlane.f32.xlu0 %v933
      %v965 = vpop.xlane.xlu0 %964
      %966 = vadd.xlane.f32.xlu0 %v935
      %v967 = vpop.xlane.xlu0 %966
      %968 = vadd.xlane.f32.xlu0 %v937
      %v969 = vpop.xlane.xlu0 %968
      %970 = vadd.xlane.f32.xlu0 %v939
      %v971 = vpop.xlane.xlu0 %970
      %972 = vadd.xlane.f32.xlu0 %v941
      %v973 = vpop.xlane.xlu0 %972
      %974 = vadd.xlane.f32.xlu0 %v943
      %v975 = vpop.xlane.xlu0 %974
      %976 = vadd.xlane.f32.xlu0 %v945
      %v977 = vpop.xlane.xlu0 %976
      %978 = vadd.xlane.f32.xlu0 %v947
      %v979 = vpop.xlane.xlu0 %978
      %980 = vadd.xlane.f32.xlu0 %v949
      %v981 = vpop.xlane.xlu0 %980
      %982 = vadd.xlane.f32.xlu0 %v951
      %v983 = vpop.xlane.xlu0 %982
      %984 = vadd.xlane.f32.xlu0 %v953
      %v985 = vpop.xlane.xlu0 %984
      %986 = vadd.xlane.f32.xlu0 %v955
      %v987 = vpop.xlane.xlu0 %986
      %v988 = vrcp.pop %v957
      %v989 = vmul.f32 %v925, %v988
      %v990 = vrcp.pop %v959
      %v991 = vmul.f32 %v927, %v990
      %v992 = vrcp.pop %v961
      %v993 = vmul.f32 %v929, %v992
      %v994 = vrcp.pop %v963
      %v995 = vmul.f32 %v931, %v994
      %v996 = vrcp.pop %v965
      %v997 = vmul.f32 %v933, %v996
      %v998 = vrcp.pop %v967
      %v999 = vmul.f32 %v935, %v998
      %v1000 = vrcp.pop %v969
      %v1001 = vmul.f32 %v937, %v1000
      %v1002 = vrcp.pop %v971
      %v1003 = vmul.f32 %v939, %v1002
      %v1004 = vrcp.pop %v973
      %v1005 = vmul.f32 %v941, %v1004
      %v1006 = vrcp.pop %v975
      %v1007 = vmul.f32 %v943, %v1006
      %v1008 = vrcp.pop %v977
      %v1009 = vmul.f32 %v945, %v1008
      %v1010 = vrcp.pop %v979
      %v1011 = vmul.f32 %v947, %v1010
      %v1012 = vrcp.pop %v981
      %v1013 = vmul.f32 %v949, %v1012
      %v1014 = vrcp.pop %v983
      %v1015 = vmul.f32 %v951, %v1014
      %v1016 = vrcp.pop %v985
      %v1017 = vmul.f32 %v953, %v1016
      %v1018 = vrcp.pop %v987
      %v1019 = vmul.f32 %v955, %v1018
      %1020 = vst [vmem:[%s280] sm:$0xff] %v989
      %1021 = vst [vmem:[%s280 + $0x8] sm:$0xff] %v991
      %1022 = vst [vmem:[%s280 + $0x10] sm:$0xff] %v993
      %1023 = vst [vmem:[%s280 + $0x18] sm:$0xff] %v995
      %1024 = vst [vmem:[%s280 + $0x20] sm:$0xff] %v997
      %1025 = vst [vmem:[%s280 + $0x28] sm:$0xff] %v999
      %1026 = vst [vmem:[%s280 + $0x30] sm:$0xff] %v1001
      %1027 = vst [vmem:[%s280 + $0x38] sm:$0xff] %v1003
      %1028 = vst [vmem:[%s280 + $0x40] sm:$0xff] %v1005
      %1029 = vst [vmem:[%s280 + $0x48] sm:$0xff] %v1007
      %1030 = vst [vmem:[%s280 + $0x50] sm:$0xff] %v1009
      %1031 = vst [vmem:[%s280 + $0x58] sm:$0xff] %v1011
      %1032 = vst [vmem:[%s280 + $0x60] sm:$0xff] %v1013
      %1033 = vst [vmem:[%s280 + $0x68] sm:$0xff] %v1015
      %1034 = vst [vmem:[%s280 + $0x70] sm:$0xff] %v1017
      %1035 = vst [vmem:[%s280 + $0x78] sm:$0xff] %v1019
      %s1036 = smul.u32 16, %s18
      %p1037 = scmp.lt.s32.totalorder %s1036, 63
      %s1038 = scalar_select %p1037, %s1036, 63
      %s1039 = smul.addr %s1038, 8
      %s1040 = scalar_lea.vmem %s7, %s1039
      // Predicated region
      $region49: #{policy_net_forward.1} parent=47 // pred_check
        %p1041 = pneg %p188
      $region50: #{policy_net_forward.1} parent=47 // pred_check_branch
        %1043 = sbr.rel (%p1041) target = $region52
      $region51: #{policy_net_forward.1} parent=47 // pred_region
        %s1044 = smul.u32 16, %s18
      $region52: #{policy_net_forward.1} parent=47 // pred_fallthru
        _
    $region48: #{policy_net_forward.1} parent=5 // pred_fallthru
      _
    %p1045 = scmp.le.s32.totalorder 2, %s13
    // Predicated region
    $region53: #{policy_net_forward.1} parent=5 // pred_check
      %p1046 = pneg %p1045
    $region54: #{policy_net_forward.1} parent=5 // pred_check_branch
      %1048 = sbr.rel (%p1046) target = $region56
    $region55: #{policy_net_forward.1} parent=5 // pred_region
      %s1049 = ssub.s32 %s13, 2
      // Predicated region
      $region57: #{policy_net_forward.1} parent=55 // pred_check
        %p1050 = pneg %p194
      $region58: #{policy_net_forward.1} parent=55 // pred_check_branch
        %1052 = sbr.rel (%p1050) target = $region60
      $region59: #{policy_net_forward.1} parent=55 // pred_region
        %s1053 = smul.u32 16, %s19
        %p1054 = scmp.lt.s32.totalorder %s1053, 63
        %s1055 = scalar_select %p1054, %s1053, 63
        %s1056 = smul.addr %s1055, 8
        %s1057 = scalar_lea.vmem %s7, %s1056
      $region60: #{policy_net_forward.1} parent=55 // pred_fallthru
        _
    $region56: #{policy_net_forward.1} parent=5 // pred_fallthru
      _
  $region6: #{policy_net_forward.1} parent=0 // loop_footer
    %s17 = sadd.s32 1, %s13
  $region7: #{policy_net_forward.1} parent=0 // loop_footer_branch
    %12 = sbr.rel target = $region3
  $region8: #{policy_net_forward.1} parent=0 // loop_exit
    _

</llo_original>
